<compile_context>
chip_gen: v5e
topology: v5e:2x2
jax: 0.10.0
libtpu: 0.0.40
codegen_flags: <defaults>
</compile_context>

<pallas_src>
import numpy as np
import jax
import jax.numpy as jnp
from jax import lax
from jax.experimental import pallas as pl
from jax.experimental.pallas import tpu as pltpu

NUM_TAGS = 27
NUM_CLASSES = 5


def _crf_tables():
    nt = NUM_TAGS
    trans = np.full((nt, nt), -100.0, np.float32)
    start = np.full((nt,), -100.0, np.float32)
    end = np.full((nt,), -100.0, np.float32)
    for i in [0, 5, 10, 15, 20, -2, -1]:
        start[i] = 0.0
    for i in range(4):
        trans[0 + i, 1 + i] = 0.0
        trans[5 + i, 6 + i] = 0.0
        trans[10 + i, 11 + i] = 0.0
        trans[15 + i, 16 + i] = 0.0
        trans[20 + i, 21 + i] = 0.0
    for i in [4, 9, 14, 19, 24]:
        trans[i, i] = 0.0
    trans[4, -1] = 0.0
    trans[9, -2] = 0.0
    trans[14, -1] = 0.0
    trans[19, -2] = 0.0
    trans[24, -2:] = 0.0
    trans[-2, 0] = 0.0
    trans[-2, 10] = 0.0
    trans[-2, -2:] = 0.0
    trans[-1, 5] = 0.0
    trans[-1, 15] = 0.0
    trans[-1, -2:] = 0.0
    for i in [4, 9, 14, 19, 24, -2, -1]:
        end[i] = 0.0
    mapping = np.repeat(np.arange(7, dtype=np.int32), [5, 5, 5, 5, 5, 1, 1])
    return trans, start, end, mapping


def _viterbi_kernel(mask_sref, em_ref, trans_ref, start_ref, end_ref,
                    out_ref, em27_scr, hist_scr, score_scr, best_scr):
    b = pl.program_id(0)
    L = em_ref.shape[1]
    NT = NUM_TAGS

    # ---- loop-invariant helpers (hoisted) ----
    lane = lax.broadcasted_iota(jnp.int32, (1, NT), 1)        # tag id on lanes
    jidx = lax.broadcasted_iota(jnp.int32, (NT, NT), 0)       # source-tag (sublane) id
    kidx = lax.broadcasted_iota(jnp.int32, (NT, NT), 1)
    ident = (jidx == kidx).astype(jnp.float32)                # 27x27 identity mask
    pos = lax.broadcasted_iota(jnp.int32, (1, L), 1)          # seq position on lanes
    trans = trans_ref[...]                                    # (27, 27)

    # ---- emissions.repeat_interleave([10,10,5,1,1]): 5 classes -> 27 tags ----
    cls_row = ((lane >= 10).astype(jnp.int32) + (lane >= 20).astype(jnp.int32)
               + (lane >= 25).astype(jnp.int32) + (lane >= 26).astype(jnp.int32))
    em5 = em_ref[0]                                           # (L, 5)
    em27 = jnp.zeros((L, NT), jnp.float32)
    for c in range(NUM_CLASSES):                              # static unroll (exact copies)
        sel = jnp.broadcast_to(cls_row == c, (L, NT))
        col = jnp.broadcast_to(em5[:, c:c + 1], (L, NT))
        em27 = jnp.where(sel, col, em27)
    em27_scr[...] = em27

    # ---- init ----
    hist_scr[...] = jnp.zeros((L, NT), jnp.int32)             # history starts at 0 (torch)
    score_scr[...] = start_ref[...] + em27[0:1, :]

    # ---- forward Viterbi recursion over the sequence ----
    @pl.loop(1, L)
    def _fwd(i):
        score_row = score_scr[...]                            # (1, 27)
        # row -> column flip via identity mask + lane reduce (layout-safe, no transpose op)
        score_col = jnp.sum(ident * jnp.broadcast_to(score_row, (NT, NT)),
                            axis=1, keepdims=True)            # (27, 1)
        ns = trans + score_col                                # ns[j,k] = trans[j,k] + score[j]
        m = jnp.max(ns, axis=0, keepdims=True)                # (1, 27) max over source tag
        idx = jnp.min(jnp.where(ns == m, jidx, NT),
                      axis=0, keepdims=True)                  # first argmax (torch tie-break)
        hist_scr[pl.ds(i - 1, 1), :] = idx
        em_i = em27_scr[pl.ds(i, 1), :]                       # (1, 27)
        new_score = m + em_i                                  # emissions shift value only
        valid = mask_sref[b, i] > 0
        score_scr[...] = jnp.where(valid, new_score, score_row)

    # ---- sequence end (scalar loop over the SMEM mask) ----
    seq_len = lax.fori_loop(0, L, lambda t, s: s + mask_sref[b, t], jnp.int32(0))
    seq_end = jnp.maximum(seq_len - 1, 0)                     # guard fully-masked samples

    # ---- end transitions + end tag, scattered into history[seq_end] ----
    final = score_scr[...] + end_ref[...]                     # (1, 27)
    fmax = jnp.max(final, axis=1, keepdims=True)              # (1, 1)
    end_tag = jnp.min(jnp.where(final == fmax, lane, NT),
                      axis=1, keepdims=True)                  # (1, 1) int32, first max
    hist_scr[pl.ds(seq_end, 1), :] = jnp.broadcast_to(end_tag, (1, NT))

    # ---- backtrace (one-hot gather; no scalar extraction from vregs) ----
    best_scr[...] = jnp.zeros((1, 1), jnp.int32)
    out_ref[0] = jnp.zeros((1, L), jnp.int32)

    @pl.loop(0, L)
    def _bwd(s):
        t = L - 1 - s
        row = hist_scr[pl.ds(t, 1), :]                        # (1, 27)
        onehot = lane == best_scr[...]
        best = jnp.sum(jnp.where(onehot, row, 0),
                       axis=1, keepdims=True)                 # (1, 1) backpointer
        best_scr[...] = best
        # mapping: tags 0-4->0, 5-9->1, 10-14->2, 15-19->3, 20-24->4, 25->5, 26->6
        mapped = ((best >= 5).astype(jnp.int32) + (best >= 10).astype(jnp.int32)
                  + (best >= 15).astype(jnp.int32) + (best >= 20).astype(jnp.int32)
                  + (best >= 25).astype(jnp.int32) + (best >= 26).astype(jnp.int32))
        out_ref[0] = jnp.where(pos == t, mapped, out_ref[0])


def decoder_forward(emissions, mask):
    """emissions: (B, 5, L) float32, mask: (B, L) {0,1}.  Returns (B, L) int32 classes."""
    B, C, L = emissions.shape
    assert C == NUM_CLASSES
    trans_np, start_np, end_np, _ = _crf_tables()
    trans = jnp.asarray(trans_np)
    start = jnp.asarray(start_np).reshape(1, NUM_TAGS)
    end = jnp.asarray(end_np).reshape(1, NUM_TAGS)

    em = jnp.transpose(emissions, (0, 2, 1)).astype(jnp.float32)   # (B, L, 5)
    mask_i = mask.astype(jnp.int32)

    grid_spec = pltpu.PrefetchScalarGridSpec(
        num_scalar_prefetch=1,                    # mask -> SMEM
        grid=(B,),
        in_specs=[
            pl.BlockSpec((1, L, NUM_CLASSES), lambda b, m: (b, 0, 0)),
            pl.BlockSpec((NUM_TAGS, NUM_TAGS), lambda b, m: (0, 0)),
            pl.BlockSpec((1, NUM_TAGS), lambda b, m: (0, 0)),
            pl.BlockSpec((1, NUM_TAGS), lambda b, m: (0, 0)),
        ],
        out_specs=pl.BlockSpec((1, 1, L), lambda b, m: (b, 0, 0)),
        scratch_shapes=[
            pltpu.VMEM((L, NUM_TAGS), jnp.float32),   # expanded emissions
            pltpu.VMEM((L, NUM_TAGS), jnp.int32),     # backpointer history
            pltpu.VMEM((1, NUM_TAGS), jnp.float32),   # running Viterbi score
            pltpu.VMEM((1, 1), jnp.int32),            # backtrace state
        ],
    )

    out = pl.pallas_call(
        _viterbi_kernel,
        out_shape=jax.ShapeDtypeStruct((B, 1, L), jnp.int32),
        grid_spec=grid_spec,
        compiler_params=pltpu.CompilerParams(
            dimension_semantics=("parallel",)),   # independent samples -> both TCs on v7x
    )(mask_i, em, trans, start, end)
    return out[:, 0, :]


# ---------------- pure-JAX reference (same math, for the self-check) ----------------
def _decoder_ref(emissions, mask):
    trans_np, start_np, end_np, mapping_np = _crf_tables()
    trans = jnp.asarray(trans_np)
    start = jnp.asarray(start_np)
    end = jnp.asarray(end_np)
    mapping = jnp.asarray(mapping_np)

    B, _, L = emissions.shape
    em = jnp.transpose(emissions, (2, 0, 1))                        # (L, B, 5)
    repeats = jnp.asarray([10, 10, 5, 1, 1], jnp.int32)
    em27 = jnp.repeat(em, repeats, axis=2, total_repeat_length=NUM_TAGS)  # (L, B, 27)
    maskT = mask.T.astype(bool)                                     # (L, B)

    score = start[None, :] + em27[0]                                # (B, 27)
    hist = jnp.zeros((L, B, NUM_TAGS), jnp.int32)
    for i in range(1, L):
        A = trans[None, :, :] + score[:, :, None]                   # (B, 27src, 27dst)
        m = A.max(axis=1)
        idx = jnp.argmax(A, axis=1).astype(jnp.int32)               # first max (torch tie-break)
        hist = hist.at[i - 1].set(idx)
        score = jnp.where(maskT[i][:, None], m + em27[i], score)
    score = score + end[None, :]
    end_tag = jnp.argmax(score, axis=1).astype(jnp.int32)           # (B,)
    seq_end = jnp.maximum(maskT.astype(jnp.int32).sum(axis=0) - 1, 0)
    hist = hist.at[seq_end, jnp.arange(B), :].set(
        jnp.broadcast_to(end_tag[:, None], (B, NUM_TAGS)))

    best = jnp.zeros((B,), jnp.int32)
    out = jnp.zeros((B, L), jnp.int32)
    for t in range(L - 1, -1, -1):
        best = hist[t, jnp.arange(B), best]
        out = out.at[:, t].set(best)
    return mapping[out]


if __name__ == "__main__":
    B, L = 2, 32
    key = jax.random.PRNGKey(0)
    k_em, _ = jax.random.split(key)
    emissions = jax.random.normal(k_em, (B, NUM_CLASSES, L), dtype=jnp.float32)
    lengths = jnp.array([29, 17], jnp.int32)
    mask = (jnp.arange(L)[None, :] < lengths[:, None]).astype(jnp.int32)   # (B, L)

    out = decoder_forward(emissions, mask)
    out = jax.block_until_ready(out)

    ref = _decoder_ref(emissions, mask)
    assert out.shape == (B, L) and out.dtype == jnp.int32
    # TODO(synk): PyTorch returns torch.long (int64); int32 is used here (TPU-native).
    assert jnp.array_equal(out, ref), f"mismatch:\n{out}\n{ref}"
    print("KERNEL_OK")
</pallas_src>

<mosaic_0001>
module attributes {stable_mosaic.version = 11 : i64} {
  func.func @_viterbi_kernel(%arg0: i32, %arg1: memref<2x32xi32, #tpu.memory_space<smem>>, %arg2: memref<1x32x5xf32, #tpu.memory_space<vmem>>, %arg3: memref<27x27xf32, #tpu.memory_space<vmem>>, %arg4: memref<1x27xf32, #tpu.memory_space<vmem>>, %arg5: memref<1x27xf32, #tpu.memory_space<vmem>>, %arg6: memref<1x1x32xi32, #tpu.memory_space<vmem>>, %arg7: memref<32x27xf32, #tpu.memory_space<vmem>>, %arg8: memref<32x27xi32, #tpu.memory_space<vmem>>, %arg9: memref<1x27xf32, #tpu.memory_space<vmem>>, %arg10: memref<1x1xi32, #tpu.memory_space<vmem>>) attributes {dimension_semantics = [#tpu.dimension_semantics<parallel>], iteration_bounds = array<i64: 2>, scalar_prefetch = 1 : i64, scratch_operands = 4 : i64, tpu.core_type = #tpu.core_type<tc>, window_params = [{transform_indices = @transform_0, window_bounds = array<i64: 1, 32, 5>}, {pipeline_mode = #tpu.pipeline_mode<synchronous>, transform_indices = @transform_1, window_bounds = array<i64: 27, 27>}, {pipeline_mode = #tpu.pipeline_mode<synchronous>, transform_indices = @transform_2, window_bounds = array<i64: 1, 27>}, {pipeline_mode = #tpu.pipeline_mode<synchronous>, transform_indices = @transform_3, window_bounds = array<i64: 1, 27>}, {transform_indices = @transform_4, window_bounds = array<i64: 1, 1, 32>}]} {
    %0 = tpu.iota {dimensions = array<i32: 1>} : vector<1x27xi32>
    %1 = tpu.iota {dimensions = array<i32: 0>} : vector<27x27xi32>
    %2 = tpu.iota {dimensions = array<i32: 1>} : vector<27x27xi32>
    %3 = arith.cmpi eq, %1, %2 : vector<27x27xi32>
    %4 = arith.extui %3 : vector<27x27xi1> to vector<27x27xi32>
    %5 = arith.sitofp %4 : vector<27x27xi32> to vector<27x27xf32>
    %6 = tpu.iota {dimensions = array<i32: 1>} : vector<1x32xi32>
    %c0 = arith.constant 0 : index
    %c0_0 = arith.constant 0 : index
    %7 = vector.load %arg3[%c0, %c0_0] : memref<27x27xf32, #tpu.memory_space<vmem>>, vector<27x27xf32>
    %c10_i32 = arith.constant 10 : i32
    %8 = vector.broadcast %c10_i32 : i32 to vector<1x27xi32>
    %9 = arith.cmpi sge, %0, %8 : vector<1x27xi32>
    %10 = arith.extui %9 : vector<1x27xi1> to vector<1x27xi32>
    %c20_i32 = arith.constant 20 : i32
    %11 = vector.broadcast %c20_i32 : i32 to vector<1x27xi32>
    %12 = arith.cmpi sge, %0, %11 : vector<1x27xi32>
    %13 = arith.extui %12 : vector<1x27xi1> to vector<1x27xi32>
    %14 = arith.addi %10, %13 : vector<1x27xi32>
    %c25_i32 = arith.constant 25 : i32
    %15 = vector.broadcast %c25_i32 : i32 to vector<1x27xi32>
    %16 = arith.cmpi sge, %0, %15 : vector<1x27xi32>
    %17 = arith.extui %16 : vector<1x27xi1> to vector<1x27xi32>
    %18 = arith.addi %14, %17 : vector<1x27xi32>
    %c26_i32 = arith.constant 26 : i32
    %19 = vector.broadcast %c26_i32 : i32 to vector<1x27xi32>
    %20 = arith.cmpi sge, %0, %19 : vector<1x27xi32>
    %21 = arith.extui %20 : vector<1x27xi1> to vector<1x27xi32>
    %22 = arith.addi %18, %21 : vector<1x27xi32>
    %c0_1 = arith.constant 0 : index
    %c0_2 = arith.constant 0 : index
    %c0_3 = arith.constant 0 : index
    %23 = vector.load %arg2[%c0_1, %c0_2, %c0_3] : memref<1x32x5xf32, #tpu.memory_space<vmem>>, vector<1x32x5xf32>
    %24 = vector.shape_cast %23 : vector<1x32x5xf32> to vector<32x5xf32>
    %cst = arith.constant 0.000000e+00 : f32
    %25 = vector.broadcast %cst : f32 to vector<32x27xf32>
    %c0_i32 = arith.constant 0 : i32
    %26 = vector.broadcast %c0_i32 : i32 to vector<1x27xi32>
    %27 = arith.cmpi eq, %22, %26 : vector<1x27xi32>
    %28 = vector.shape_cast %27 : vector<1x27xi1> to vector<1x27xi1>
    %29 = vector.broadcast %28 : vector<1x27xi1> to vector<32x27xi1>
    %30 = vector.extract_strided_slice %24 {offsets = [0, 0], sizes = [32, 1], strides = [1, 1]} : vector<32x5xf32> to vector<32x1xf32>
    %31 = vector.shape_cast %30 : vector<32x1xf32> to vector<32x1xf32>
    %32 = vector.broadcast %31 : vector<32x1xf32> to vector<32x27xf32>
    %33 = arith.select %29, %32, %25 : vector<32x27xi1>, vector<32x27xf32>
    %c1_i32 = arith.constant 1 : i32
    %34 = vector.broadcast %c1_i32 : i32 to vector<1x27xi32>
    %35 = arith.cmpi eq, %22, %34 : vector<1x27xi32>
    %36 = vector.shape_cast %35 : vector<1x27xi1> to vector<1x27xi1>
    %37 = vector.broadcast %36 : vector<1x27xi1> to vector<32x27xi1>
    %38 = vector.extract_strided_slice %24 {offsets = [0, 1], sizes = [32, 1], strides = [1, 1]} : vector<32x5xf32> to vector<32x1xf32>
    %39 = vector.shape_cast %38 : vector<32x1xf32> to vector<32x1xf32>
    %40 = vector.broadcast %39 : vector<32x1xf32> to vector<32x27xf32>
    %41 = arith.select %37, %40, %33 : vector<32x27xi1>, vector<32x27xf32>
    %c2_i32 = arith.constant 2 : i32
    %42 = vector.broadcast %c2_i32 : i32 to vector<1x27xi32>
    %43 = arith.cmpi eq, %22, %42 : vector<1x27xi32>
    %44 = vector.shape_cast %43 : vector<1x27xi1> to vector<1x27xi1>
    %45 = vector.broadcast %44 : vector<1x27xi1> to vector<32x27xi1>
    %46 = vector.extract_strided_slice %24 {offsets = [0, 2], sizes = [32, 1], strides = [1, 1]} : vector<32x5xf32> to vector<32x1xf32>
    %47 = vector.shape_cast %46 : vector<32x1xf32> to vector<32x1xf32>
    %48 = vector.broadcast %47 : vector<32x1xf32> to vector<32x27xf32>
    %49 = arith.select %45, %48, %41 : vector<32x27xi1>, vector<32x27xf32>
    %c3_i32 = arith.constant 3 : i32
    %50 = vector.broadcast %c3_i32 : i32 to vector<1x27xi32>
    %51 = arith.cmpi eq, %22, %50 : vector<1x27xi32>
    %52 = vector.shape_cast %51 : vector<1x27xi1> to vector<1x27xi1>
    %53 = vector.broadcast %52 : vector<1x27xi1> to vector<32x27xi1>
    %54 = vector.extract_strided_slice %24 {offsets = [0, 3], sizes = [32, 1], strides = [1, 1]} : vector<32x5xf32> to vector<32x1xf32>
    %55 = vector.shape_cast %54 : vector<32x1xf32> to vector<32x1xf32>
    %56 = vector.broadcast %55 : vector<32x1xf32> to vector<32x27xf32>
    %57 = arith.select %53, %56, %49 : vector<32x27xi1>, vector<32x27xf32>
    %c4_i32 = arith.constant 4 : i32
    %58 = vector.broadcast %c4_i32 : i32 to vector<1x27xi32>
    %59 = arith.cmpi eq, %22, %58 : vector<1x27xi32>
    %60 = vector.shape_cast %59 : vector<1x27xi1> to vector<1x27xi1>
    %61 = vector.broadcast %60 : vector<1x27xi1> to vector<32x27xi1>
    %62 = vector.extract_strided_slice %24 {offsets = [0, 4], sizes = [32, 1], strides = [1, 1]} : vector<32x5xf32> to vector<32x1xf32>
    %63 = vector.shape_cast %62 : vector<32x1xf32> to vector<32x1xf32>
    %64 = vector.broadcast %63 : vector<32x1xf32> to vector<32x27xf32>
    %65 = arith.select %61, %64, %57 : vector<32x27xi1>, vector<32x27xf32>
    %c0_4 = arith.constant 0 : index
    %c0_5 = arith.constant 0 : index
    %66 = vector.load %arg7[%c0_4, %c0_5] : memref<32x27xf32, #tpu.memory_space<vmem>>, vector<32x27xf32>
    tpu.vector_store %arg7[%c0_4, %c0_5], %65 {strides = array<i32>} : memref<32x27xf32, #tpu.memory_space<vmem>>, vector<32x27xf32>,
    %c0_i32_6 = arith.constant 0 : i32
    %67 = vector.broadcast %c0_i32_6 : i32 to vector<32x27xi32>
    %c0_7 = arith.constant 0 : index
    %c0_8 = arith.constant 0 : index
    %68 = vector.load %arg8[%c0_7, %c0_8] : memref<32x27xi32, #tpu.memory_space<vmem>>, vector<32x27xi32>
    tpu.vector_store %arg8[%c0_7, %c0_8], %67 {strides = array<i32>} : memref<32x27xi32, #tpu.memory_space<vmem>>, vector<32x27xi32>,
    %c0_9 = arith.constant 0 : index
    %c0_10 = arith.constant 0 : index
    %69 = vector.load %arg4[%c0_9, %c0_10] : memref<1x27xf32, #tpu.memory_space<vmem>>, vector<1x27xf32>
    %70 = vector.extract_strided_slice %65 {offsets = [0, 0], sizes = [1, 27], strides = [1, 1]} : vector<32x27xf32> to vector<1x27xf32>
    %71 = arith.addf %69, %70 : vector<1x27xf32>
    %c0_11 = arith.constant 0 : index
    %c0_12 = arith.constant 0 : index
    %72 = vector.load %arg9[%c0_11, %c0_12] : memref<1x27xf32, #tpu.memory_space<vmem>>, vector<1x27xf32>
    tpu.vector_store %arg9[%c0_11, %c0_12], %71 {strides = array<i32>} : memref<1x27xf32, #tpu.memory_space<vmem>>, vector<1x27xf32>,
    %c0_i32_13 = arith.constant 0 : i32
    %c31_i32 = arith.constant 31 : i32
    %73 = arith.addi %c0_i32_13, %c31_i32 : i32
    %c1_i32_14 = arith.constant 1 : i32
    scf.for %arg11 = %c0_i32_13 to %73 step %c1_i32_14  : i32 {
      %c1_i32_40 = arith.constant 1 : i32
      %100 = arith.muli %arg11, %c1_i32_40 : i32
      %c1_i32_41 = arith.constant 1 : i32
      %101 = arith.addi %c1_i32_41, %100 : i32
      %c0_42 = arith.constant 0 : index
      %c0_43 = arith.constant 0 : index
      %102 = vector.load %arg9[%c0_42, %c0_43] : memref<1x27xf32, #tpu.memory_space<vmem>>, vector<1x27xf32>
      %103 = vector.shape_cast %102 : vector<1x27xf32> to vector<1x27xf32>
      %104 = vector.broadcast %103 : vector<1x27xf32> to vector<27x27xf32>
      %105 = arith.mulf %5, %104 : vector<27x27xf32>
      %cst_44 = arith.constant dense<0.000000e+00> : vector<27xf32>
      %106 = vector.multi_reduction <add>, %105, %cst_44 [1] : vector<27x27xf32> to vector<27xf32>
      %107 = vector.shape_cast %106 : vector<27xf32> to vector<27x1xf32>
      %108 = vector.broadcast %107 : vector<27x1xf32> to vector<27x27xf32>
      %109 = arith.addf %7, %108 : vector<27x27xf32>
      %cst_45 = arith.constant dense<0xFF800000> : vector<27xf32>
      %110 = vector.multi_reduction <maximumf>, %109, %cst_45 [0] : vector<27x27xf32> to vector<27xf32>
      %111 = vector.shape_cast %110 : vector<27xf32> to vector<1x27xf32>
      %112 = vector.broadcast %111 : vector<1x27xf32> to vector<27x27xf32>
      %113 = arith.cmpf oeq, %109, %112 : vector<27x27xf32>
      %c27_i32_46 = arith.constant 27 : i32
      %114 = vector.broadcast %c27_i32_46 : i32 to vector<27x27xi32>
      %115 = arith.select %113, %1, %114 : vector<27x27xi1>, vector<27x27xi32>
      %cst_47 = arith.constant dense<2147483647> : vector<27xi32>
      %116 = vector.multi_reduction <minsi>, %115, %cst_47 [0] : vector<27x27xi32> to vector<27xi32>
      %117 = vector.shape_cast %116 : vector<27xi32> to vector<1x27xi32>
      %c1_i32_48 = arith.constant 1 : i32
      %118 = arith.subi %101, %c1_i32_48 : i32
      %119 = arith.index_cast %118 : i32 to index
      %c0_49 = arith.constant 0 : index
      %120 = vector.load %arg8[%119, %c0_49] : memref<32x27xi32, #tpu.memory_space<vmem>>, vector<1x27xi32>
      tpu.vector_store %arg8[%119, %c0_49], %117 {strides = array<i32>} : memref<32x27xi32, #tpu.memory_space<vmem>>, vector<1x27xi32>,
      %121 = arith.index_cast %101 : i32 to index
      %c0_50 = arith.constant 0 : index
      %122 = vector.load %arg7[%121, %c0_50] : memref<32x27xf32, #tpu.memory_space<vmem>>, vector<1x27xf32>
      %123 = arith.addf %111, %122 : vector<1x27xf32>
      %124 = arith.index_cast %arg0 : i32 to index
      %125 = arith.index_cast %101 : i32 to index
      %126 = memref.load %arg1[%124, %125] : memref<2x32xi32, #tpu.memory_space<smem>>
      %c0_i32_51 = arith.constant 0 : i32
      %127 = arith.cmpi sgt, %126, %c0_i32_51 : i32
      %128 = arith.select %127, %123, %102 : vector<1x27xf32>
      %c0_52 = arith.constant 0 : index
      %c0_53 = arith.constant 0 : index
      %129 = vector.load %arg9[%c0_52, %c0_53] : memref<1x27xf32, #tpu.memory_space<vmem>>, vector<1x27xf32>
      tpu.vector_store %arg9[%c0_52, %c0_53], %128 {strides = array<i32>} : memref<1x27xf32, #tpu.memory_space<vmem>>, vector<1x27xf32>,
    }
    %c31_i32_15 = arith.constant 31 : i32
    %c0_i32_16 = arith.constant 0 : i32
    %c0_i32_17 = arith.constant 0 : i32
    %c32_i32 = arith.constant 32 : i32
    %74 = arith.addi %c0_i32_17, %c32_i32 : i32
    %c1_i32_18 = arith.constant 1 : i32
    %75 = scf.for %arg11 = %c0_i32_17 to %74 step %c1_i32_18 iter_args(%arg12 = %c0_i32_16) -> (i32)  : i32 {
      %100 = arith.index_cast %arg0 : i32 to index
      %101 = arith.index_cast %arg11 : i32 to index
      %102 = memref.load %arg1[%100, %101] : memref<2x32xi32, #tpu.memory_space<smem>>
      %103 = arith.addi %arg12, %102 : i32
      scf.yield %103 : i32
    }
    %c32_i32_19 = arith.constant 32 : i32
    %c1_i32_20 = arith.constant 1 : i32
    %76 = arith.subi %75, %c1_i32_20 : i32
    %c0_i32_21 = arith.constant 0 : i32
    %77 = arith.maxsi %76, %c0_i32_21 : i32
    %c0_22 = arith.constant 0 : index
    %c0_23 = arith.constant 0 : index
    %78 = vector.load %arg9[%c0_22, %c0_23] : memref<1x27xf32, #tpu.memory_space<vmem>>, vector<1x27xf32>
    %c0_24 = arith.constant 0 : index
    %c0_25 = arith.constant 0 : index
    %79 = vector.load %arg5[%c0_24, %c0_25] : memref<1x27xf32, #tpu.memory_space<vmem>>, vector<1x27xf32>
    %80 = arith.addf %78, %79 : vector<1x27xf32>
    %cst_26 = arith.constant dense<0xFF800000> : vector<1xf32>
    %81 = vector.multi_reduction <maximumf>, %80, %cst_26 [1] : vector<1x27xf32> to vector<1xf32>
    %82 = vector.shape_cast %81 : vector<1xf32> to vector<1x1xf32>
    %83 = vector.broadcast %82 : vector<1x1xf32> to vector<1x27xf32>
    %84 = arith.cmpf oeq, %80, %83 : vector<1x27xf32>
    %c27_i32 = arith.constant 27 : i32
    %85 = vector.broadcast %c27_i32 : i32 to vector<1x27xi32>
    %86 = arith.select %84, %0, %85 : vector<1x27xi1>, vector<1x27xi32>
    %cst_27 = arith.constant dense<2147483647> : vector<1xi32>
    %87 = vector.multi_reduction <minsi>, %86, %cst_27 [1] : vector<1x27xi32> to vector<1xi32>
    %88 = vector.shape_cast %87 : vector<1xi32> to vector<1x1xi32>
    %89 = vector.shape_cast %88 : vector<1x1xi32> to vector<1x1xi32>
    %90 = vector.broadcast %89 : vector<1x1xi32> to vector<1x27xi32>
    %91 = arith.index_cast %77 : i32 to index
    %c0_28 = arith.constant 0 : index
    %92 = vector.load %arg8[%91, %c0_28] : memref<32x27xi32, #tpu.memory_space<vmem>>, vector<1x27xi32>
    tpu.vector_store %arg8[%91, %c0_28], %90 {strides = array<i32>} : memref<32x27xi32, #tpu.memory_space<vmem>>, vector<1x27xi32>,
    %c0_i32_29 = arith.constant 0 : i32
    %93 = vector.broadcast %c0_i32_29 : i32 to vector<1x1xi32>
    %c0_30 = arith.constant 0 : index
    %c0_31 = arith.constant 0 : index
    %94 = vector.load %arg10[%c0_30, %c0_31] : memref<1x1xi32, #tpu.memory_space<vmem>>, vector<1x1xi32>
    tpu.vector_store %arg10[%c0_30, %c0_31], %93 {strides = array<i32>} : memref<1x1xi32, #tpu.memory_space<vmem>>, vector<1x1xi32>,
    %c0_i32_32 = arith.constant 0 : i32
    %95 = vector.broadcast %c0_i32_32 : i32 to vector<1x32xi32>
    %c0_33 = arith.constant 0 : index
    %c0_34 = arith.constant 0 : index
    %c0_35 = arith.constant 0 : index
    %96 = vector.load %arg6[%c0_33, %c0_34, %c0_35] : memref<1x1x32xi32, #tpu.memory_space<vmem>>, vector<1x1x32xi32>
    %97 = vector.shape_cast %96 : vector<1x1x32xi32> to vector<1x32xi32>
    %98 = vector.shape_cast %95 : vector<1x32xi32> to vector<1x1x32xi32>
    tpu.vector_store %arg6[%c0_33, %c0_34, %c0_35], %98 {strides = array<i32>} : memref<1x1x32xi32, #tpu.memory_space<vmem>>, vector<1x1x32xi32>,
    %c0_i32_36 = arith.constant 0 : i32
    %c32_i32_37 = arith.constant 32 : i32
    %99 = arith.addi %c0_i32_36, %c32_i32_37 : i32
    %c1_i32_38 = arith.constant 1 : i32
    scf.for %arg11 = %c0_i32_36 to %99 step %c1_i32_38  : i32 {
      %c1_i32_40 = arith.constant 1 : i32
      %100 = arith.muli %arg11, %c1_i32_40 : i32
      %c0_i32_41 = arith.constant 0 : i32
      %101 = arith.addi %c0_i32_41, %100 : i32
      %c31_i32_42 = arith.constant 31 : i32
      %102 = arith.subi %c31_i32_42, %101 : i32
      %103 = arith.index_cast %102 : i32 to index
      %c0_43 = arith.constant 0 : index
      %104 = vector.load %arg8[%103, %c0_43] : memref<32x27xi32, #tpu.memory_space<vmem>>, vector<1x27xi32>
      %c0_44 = arith.constant 0 : index
      %c0_45 = arith.constant 0 : index
      %105 = vector.load %arg10[%c0_44, %c0_45] : memref<1x1xi32, #tpu.memory_space<vmem>>, vector<1x1xi32>
      %106 = vector.broadcast %105 : vector<1x1xi32> to vector<1x27xi32>
      %107 = arith.cmpi eq, %0, %106 : vector<1x27xi32>
      %c0_i32_46 = arith.constant 0 : i32
      %108 = vector.broadcast %c0_i32_46 : i32 to vector<1x27xi32>
      %109 = arith.select %107, %104, %108 : vector<1x27xi1>, vector<1x27xi32>
      %cst_47 = arith.constant dense<0> : vector<1xi32>
      %110 = vector.multi_reduction <add>, %109, %cst_47 [1] : vector<1x27xi32> to vector<1xi32>
      %111 = vector.shape_cast %110 : vector<1xi32> to vector<1x1xi32>
      %c0_48 = arith.constant 0 : index
      %c0_49 = arith.constant 0 : index
      %112 = vector.load %arg10[%c0_48, %c0_49] : memref<1x1xi32, #tpu.memory_space<vmem>>, vector<1x1xi32>
      tpu.vector_store %arg10[%c0_48, %c0_49], %111 {strides = array<i32>} : memref<1x1xi32, #tpu.memory_space<vmem>>, vector<1x1xi32>,
      %c5_i32 = arith.constant 5 : i32
      %113 = vector.broadcast %c5_i32 : i32 to vector<1x1xi32>
      %114 = arith.cmpi sge, %111, %113 : vector<1x1xi32>
      %115 = arith.extui %114 : vector<1x1xi1> to vector<1x1xi32>
      %c10_i32_50 = arith.constant 10 : i32
      %116 = vector.broadcast %c10_i32_50 : i32 to vector<1x1xi32>
      %117 = arith.cmpi sge, %111, %116 : vector<1x1xi32>
      %118 = arith.extui %117 : vector<1x1xi1> to vector<1x1xi32>
      %119 = arith.addi %115, %118 : vector<1x1xi32>
      %c15_i32 = arith.constant 15 : i32
      %120 = vector.broadcast %c15_i32 : i32 to vector<1x1xi32>
      %121 = arith.cmpi sge, %111, %120 : vector<1x1xi32>
      %122 = arith.extui %121 : vector<1x1xi1> to vector<1x1xi32>
      %123 = arith.addi %119, %122 : vector<1x1xi32>
      %c20_i32_51 = arith.constant 20 : i32
      %124 = vector.broadcast %c20_i32_51 : i32 to vector<1x1xi32>
      %125 = arith.cmpi sge, %111, %124 : vector<1x1xi32>
      %126 = arith.extui %125 : vector<1x1xi1> to vector<1x1xi32>
      %127 = arith.addi %123, %126 : vector<1x1xi32>
      %c25_i32_52 = arith.constant 25 : i32
      %128 = vector.broadcast %c25_i32_52 : i32 to vector<1x1xi32>
      %129 = arith.cmpi sge, %111, %128 : vector<1x1xi32>
      %130 = arith.extui %129 : vector<1x1xi1> to vector<1x1xi32>
      %131 = arith.addi %127, %130 : vector<1x1xi32>
      %c26_i32_53 = arith.constant 26 : i32
      %132 = vector.broadcast %c26_i32_53 : i32 to vector<1x1xi32>
      %133 = arith.cmpi sge, %111, %132 : vector<1x1xi32>
      %134 = arith.extui %133 : vector<1x1xi1> to vector<1x1xi32>
      %135 = arith.addi %131, %134 : vector<1x1xi32>
      %136 = vector.broadcast %102 : i32 to vector<1x32xi32>
      %137 = arith.cmpi eq, %6, %136 : vector<1x32xi32>
      %c0_54 = arith.constant 0 : index
      %c0_55 = arith.constant 0 : index
      %c0_56 = arith.constant 0 : index
      %138 = vector.load %arg6[%c0_54, %c0_55, %c0_56] : memref<1x1x32xi32, #tpu.memory_space<vmem>>, vector<1x1x32xi32>
      %139 = vector.shape_cast %138 : vector<1x1x32xi32> to vector<1x32xi32>
      %140 = vector.shape_cast %135 : vector<1x1xi32> to vector<1x1xi32>
      %141 = vector.broadcast %140 : vector<1x1xi32> to vector<1x32xi32>
      %142 = arith.select %137, %141, %139 : vector<1x32xi1>, vector<1x32xi32>
      %c0_57 = arith.constant 0 : index
      %c0_58 = arith.constant 0 : index
      %c0_59 = arith.constant 0 : index
      %143 = vector.load %arg6[%c0_57, %c0_58, %c0_59] : memref<1x1x32xi32, #tpu.memory_space<vmem>>, vector<1x1x32xi32>
      %144 = vector.shape_cast %143 : vector<1x1x32xi32> to vector<1x32xi32>
      %145 = vector.shape_cast %142 : vector<1x32xi32> to vector<1x1x32xi32>
      tpu.vector_store %arg6[%c0_57, %c0_58, %c0_59], %145 {strides = array<i32>} : memref<1x1x32xi32, #tpu.memory_space<vmem>>, vector<1x1x32xi32>,
    }
    %c32_i32_39 = arith.constant 32 : i32
    return
  }
  func.func @transform_0(%arg0: i32, %arg1: memref<2x32xi32, #tpu.memory_space<smem>>) -> (i32, i32, i32) {
    %c0_i32 = arith.constant 0 : i32
    %c0_i32_0 = arith.constant 0 : i32
    %c0_i32_1 = arith.constant 0 : i32
    return %arg0, %c0_i32, %c0_i32_0 : i32, i32, i32
  }
  func.func @transform_1(%arg0: i32, %arg1: memref<2x32xi32, #tpu.memory_space<smem>>) -> (i32, i32) {
    %c0_i32 = arith.constant 0 : i32
    %c0_i32_0 = arith.constant 0 : i32
    %c0_i32_1 = arith.constant 0 : i32
    return %c0_i32, %c0_i32_0 : i32, i32
  }
  func.func @transform_2(%arg0: i32, %arg1: memref<2x32xi32, #tpu.memory_space<smem>>) -> (i32, i32) {
    %c0_i32 = arith.constant 0 : i32
    %c0_i32_0 = arith.constant 0 : i32
    %c0_i32_1 = arith.constant 0 : i32
    return %c0_i32, %c0_i32_0 : i32, i32
  }
  func.func @transform_3(%arg0: i32, %arg1: memref<2x32xi32, #tpu.memory_space<smem>>) -> (i32, i32) {
    %c0_i32 = arith.constant 0 : i32
    %c0_i32_0 = arith.constant 0 : i32
    %c0_i32_1 = arith.constant 0 : i32
    return %c0_i32, %c0_i32_0 : i32, i32
  }
  func.func @transform_4(%arg0: i32, %arg1: memref<2x32xi32, #tpu.memory_space<smem>>) -> (i32, i32, i32) {
    %c0_i32 = arith.constant 0 : i32
    %c0_i32_0 = arith.constant 0 : i32
    %c0_i32_1 = arith.constant 0 : i32
    return %arg0, %c0_i32, %c0_i32_0 : i32, i32, i32
  }
}

</mosaic_0001>

<llo_original>
// kernel: tpu_custom_call.1
$region0: #{tpu_custom_call.1}
  #allocation0 [shape = 'u32[]', space=smem, size = 0x4, offset = 0x4, fixed_abs, tag = 'smem constant byte address 0x4 - core index']
  #allocation1 [shape = 'u32[72,128]{1,0:T(1,128)}', space=vmem, size = 0x9000, scoped, tag = 'internal scratch']
  #allocation2 [shape = 'f32[32,27]{1,0:T(8,128)}', space=vmem, size = 0x4000, scoped, tag = 'scratch operand']
  #allocation3 [shape = 's32[32,27]{1,0:T(8,128)}', space=vmem, size = 0x4000, scoped, tag = 'scratch operand']
  #allocation4 [shape = 'f32[1,27]{1,0:T(1,128)}', space=vmem, size = 0x200, scoped, tag = 'scratch operand']
  #allocation5 [shape = 's32[1,1]{1,0:T(1,128)}', space=vmem, size = 0x200, scoped, tag = 'scratch operand']
  #allocation6 [shape = 's32[1]{0}', space=sflag, size = 0x4, scoped, tag = 'scoped memory for tpu_custom_call.1']
  #allocation7 [shape = 'u8[1024]{0}', space=smem, size = 0x400, scoped, tag = 'prefetched SMEM operand 0']
  %s0 = inlined_call_operand.vmem [shape: s32[2,32], index: 0, kind: input, shape index: {}]
  %s1 = inlined_call_operand.vmem [shape: f32[2,32,5], index: 1, kind: input, shape index: {}]
  %s2 = inlined_call_operand.vmem [shape: f32[27,27], index: 2, kind: input, shape index: {}]
  %s3 = inlined_call_operand.vmem [shape: f32[1,27], index: 3, kind: input, shape index: {}]
  %s4 = inlined_call_operand.vmem [shape: f32[1,27], index: 4, kind: input, shape index: {}]
  %s5 = inlined_call_operand.hbm [shape: s32[2,1,32], index: 5, kind: output, shape index: {}]
  %s6 = sld [smem:[#allocation0]]
  $region70: #{tpu_custom_call.1} parent=0
    _
  %s8 = ssub.s32 1, %s6
  %s9 = scalar_select 0, %s8, %s6
  %s11 = sshll.u32 %s0, 4
  %s12 = int_to_ptr.vmem [resolvable:$true] %s11
  %14 = dma.vmem_to_smem %s12, 32, [#allocation7], [#allocation6]
  %16 = dma.done [#allocation6], 32
  %17 = sfence
  $region1: #{tpu_custom_call.1} parent=0
    #allocation8 [shape = 'u8[1024]{0}', space=vmem, size = 0x400, scoped, tag = 'output window, operand 0']
    #allocation9 [shape = 's32[2]{0}', space=sflag, size = 0x8, scoped, tag = 'scoped memory for tpu_custom_call.1']
    %18 = vsyncpa [#allocation9], 0
    %s19 = scalar_lea.sflag [#allocation9], 1
    %20 = vsyncpa %s19, 0
    loop: start=0, step=1, limit=4
    $region2: #{tpu_custom_call.1} parent=1 // loop_pre_header
      _
    $region3: #{tpu_custom_call.1} parent=1 // loop_header
      %s22 = sphi 0, %s26
      %p23 = scmp.ge.s32.totalorder %s22, 4
      %s32 = sphi 0, %s34
      %s35 = sphi 0, %s32
      %s36 = sphi 0, %s35
      %s52 = sphi 0, %s36
      %s56 = sphi 0, %s56
      %s58 = sphi 0, %s56
      %s59 = sphi 0, %s58
      %s73 = sphi 0, %s59
      %s77 = sphi 0, %s77
      %s79 = sphi 0, %s77
      %s80 = sphi 0, %s79
      %s94 = sphi 0, %s80
      %s98 = sphi 0, %s98
      %s100 = sphi 0, %s98
      %s101 = sphi 0, %s100
      %s115 = sphi 0, %s101
      %s121 = sphi 0, %s123
      %s124 = sphi 0, %s121
      %s125 = sphi 0, %s124
      %s141 = sphi 0, %s125
    $region4: #{tpu_custom_call.1} parent=1 // loop_header_branch
      %25 = sbr.rel (%p23) target = $region8
    $region5: #{tpu_custom_call.1} parent=1 // loop_body
      %s27 = ssub.s32 %s22, 1
      %s28 = ssub.s32 %s22, 2
      %s29 = sadd.s32 %s22, 1
      %s30 = ssub.s32 %s22, %s29
      %p31 = scmp.eq.s32.totalorder %s30, 0
      %s33 = sadd.s32 %s32, 1
      %s34 = scalar_select %p31, %s32, %s33
      %p37 = pneg %p31
      %p38 = scmp.eq.s32.totalorder %s22, 1
      %p39 = por %p37, %p38
      %p40 = scmp.ne.s32.totalorder %s32, %s35
      %p41 = scmp.eq.s32.totalorder %s22, 0
      %p42 = por %p40, %p41
      %p43 = scmp.ne.s32.totalorder %s32, %s35
      %p44 = scmp.eq.s32.totalorder %s27, 1
      %p45 = por %p43, %p44
      %p46 = scmp.ne.s32.totalorder %s35, %s36
      %p47 = scmp.eq.s32.totalorder %s27, 0
      %p48 = por %p46, %p47
      %p49 = scmp.ne.s32.totalorder %s35, %s36
      %p50 = scmp.eq.s32.totalorder %s28, 1
      %p51 = por %p49, %p50
      %p53 = scmp.ne.s32.totalorder %s36, %s52
      %p54 = scmp.eq.s32.totalorder %s28, 0
      %p55 = por %p53, %p54
      %s57 = sadd.s32 %s56, 1
      %p60 = scmp.eq.s32.totalorder %s22, 1
      %p61 = scmp.ne.s32.totalorder %s56, %s58
      %p62 = scmp.eq.s32.totalorder %s22, 0
      %p63 = por %p61, %p62
      %p64 = scmp.ne.s32.totalorder %s56, %s58
      %p65 = scmp.eq.s32.totalorder %s27, 1
      %p66 = por %p64, %p65
      %p67 = scmp.ne.s32.totalorder %s58, %s59
      %p68 = scmp.eq.s32.totalorder %s27, 0
      %p69 = por %p67, %p68
      %p70 = scmp.ne.s32.totalorder %s58, %s59
      %p71 = scmp.eq.s32.totalorder %s28, 1
      %p72 = por %p70, %p71
      %p74 = scmp.ne.s32.totalorder %s59, %s73
      %p75 = scmp.eq.s32.totalorder %s28, 0
      %p76 = por %p74, %p75
      %s78 = sadd.s32 %s77, 1
      %p81 = scmp.eq.s32.totalorder %s22, 1
      %p82 = scmp.ne.s32.totalorder %s77, %s79
      %p83 = scmp.eq.s32.totalorder %s22, 0
      %p84 = por %p82, %p83
      %p85 = scmp.ne.s32.totalorder %s77, %s79
      %p86 = scmp.eq.s32.totalorder %s27, 1
      %p87 = por %p85, %p86
      %p88 = scmp.ne.s32.totalorder %s79, %s80
      %p89 = scmp.eq.s32.totalorder %s27, 0
      %p90 = por %p88, %p89
      %p91 = scmp.ne.s32.totalorder %s79, %s80
      %p92 = scmp.eq.s32.totalorder %s28, 1
      %p93 = por %p91, %p92
      %p95 = scmp.ne.s32.totalorder %s80, %s94
      %p96 = scmp.eq.s32.totalorder %s28, 0
      %p97 = por %p95, %p96
      %s99 = sadd.s32 %s98, 1
      %p102 = scmp.eq.s32.totalorder %s22, 1
      %p103 = scmp.ne.s32.totalorder %s98, %s100
      %p104 = scmp.eq.s32.totalorder %s22, 0
      %p105 = por %p103, %p104
      %p106 = scmp.ne.s32.totalorder %s98, %s100
      %p107 = scmp.eq.s32.totalorder %s27, 1
      %p108 = por %p106, %p107
      %p109 = scmp.ne.s32.totalorder %s100, %s101
      %p110 = scmp.eq.s32.totalorder %s27, 0
      %p111 = por %p109, %p110
      %p112 = scmp.ne.s32.totalorder %s100, %s101
      %p113 = scmp.eq.s32.totalorder %s28, 1
      %p114 = por %p112, %p113
      %p116 = scmp.ne.s32.totalorder %s101, %s115
      %p117 = scmp.eq.s32.totalorder %s28, 0
      %p118 = por %p116, %p117
      %s119 = ssub.s32 %s22, %s29
      %p120 = scmp.eq.s32.totalorder %s119, 0
      %s122 = sadd.s32 %s121, 1
      %s123 = scalar_select %p120, %s121, %s122
      %p126 = pneg %p120
      %p127 = scmp.eq.s32.totalorder %s22, 1
      %p128 = por %p126, %p127
      %p129 = scmp.ne.s32.totalorder %s121, %s124
      %p130 = scmp.eq.s32.totalorder %s22, 0
      %p131 = por %p129, %p130
      %p132 = scmp.ne.s32.totalorder %s121, %s124
      %p133 = scmp.eq.s32.totalorder %s27, 1
      %p134 = por %p132, %p133
      %p135 = scmp.ne.s32.totalorder %s124, %s125
      %p136 = scmp.eq.s32.totalorder %s27, 0
      %p137 = por %p135, %p136
      %p138 = scmp.ne.s32.totalorder %s124, %s125
      %p139 = scmp.eq.s32.totalorder %s28, 1
      %p140 = por %p138, %p139
      %p142 = scmp.ne.s32.totalorder %s125, %s141
      %p143 = scmp.eq.s32.totalorder %s28, 0
      %p144 = por %p142, %p143
      %p145 = scmp.le.s32.totalorder 1, %s22
      %p146 = scmp.lt.s32.totalorder %s22, 3
      %p147 = pnand %p145, %p146
      %p148 = pneg %p147
      // Predicated region
      $region9: #{tpu_custom_call.1} parent=5 // pred_check
        _
      $region10: #{tpu_custom_call.1} parent=5 // pred_check_branch
        %150 = sbr.rel (%p147) target = $region12
      $region11: #{tpu_custom_call.1} parent=5 // pred_region
        %s151 = ssub.s32 %s22, 1
        // Predicated region
        $region13: #{tpu_custom_call.1} parent=11 // pred_check
          %p152 = pneg %p69
        $region14: #{tpu_custom_call.1} parent=11 // pred_check_branch
          %154 = sbr.rel (%p152) target = $region16
        $region15: #{tpu_custom_call.1} parent=11 // pred_region
          _
        $region16: #{tpu_custom_call.1} parent=11 // pred_fallthru
          _
        // Predicated region
        $region17: #{tpu_custom_call.1} parent=11 // pred_check
          %p155 = pneg %p90
        $region18: #{tpu_custom_call.1} parent=11 // pred_check_branch
          %157 = sbr.rel (%p155) target = $region20
        $region19: #{tpu_custom_call.1} parent=11 // pred_region
          _
        $region20: #{tpu_custom_call.1} parent=11 // pred_fallthru
          _
        // Predicated region
        $region21: #{tpu_custom_call.1} parent=11 // pred_check
          %p158 = pneg %p111
        $region22: #{tpu_custom_call.1} parent=11 // pred_check_branch
          %160 = sbr.rel (%p158) target = $region24
        $region23: #{tpu_custom_call.1} parent=11 // pred_region
          _
        $region24: #{tpu_custom_call.1} parent=11 // pred_fallthru
          _
      $region12: #{tpu_custom_call.1} parent=5 // pred_fallthru
        _
      %p161 = scmp.lt.s32.totalorder %s22, 2
      // Predicated region
      $region25: #{tpu_custom_call.1} parent=5 // pred_check
        %p162 = pneg %p161
      $region26: #{tpu_custom_call.1} parent=5 // pred_check_branch
        %164 = sbr.rel (%p162) target = $region28
      $region27: #{tpu_custom_call.1} parent=5 // pred_region
        // Predicated region
        $region29: #{tpu_custom_call.1} parent=27 // pred_check
          %p165 = pneg %p42
        $region30: #{tpu_custom_call.1} parent=27 // pred_check_branch
          %167 = sbr.rel (%p165) target = $region32
        $region31: #{tpu_custom_call.1} parent=27 // pred_region
          %p168 = scmp.lt.s32.totalorder %s22, 1
          %s169 = scalar_select %p168, %s22, 1
          %s170 = smul.addr %s169, 4
          %s171 = smul.addr %s170, 8
          %s172 = scalar_lea.vmem %s1, %s171
        $region32: #{tpu_custom_call.1} parent=27 // pred_fallthru
          _
      $region28: #{tpu_custom_call.1} parent=5 // pred_fallthru
        _
      %p173 = scmp.le.s32.totalorder 1, %s22
      %p174 = scmp.lt.s32.totalorder %s22, 3
      %p175 = pnand %p173, %p174
      %p176 = pneg %p175
      // Predicated region
      $region33: #{tpu_custom_call.1} parent=5 // pred_check
        _
      $region34: #{tpu_custom_call.1} parent=5 // pred_check_branch
        %178 = sbr.rel (%p175) target = $region36
      $region35: #{tpu_custom_call.1} parent=5 // pred_region
        %s179 = ssub.s32 %s22, 1
        %p180 = scmp.lt.s32.totalorder %s27, 1
        %s181 = scalar_select %p180, %s27, 1
        %s182 = smul.addr %s181, 4
        %s183 = smul.addr %s182, 8
        %s184 = scalar_lea.vmem %s1, %s183
        %p185 = pneg %p48
        %p186 = pneg %p45
        %p187 = pneg %p69
        %p188 = pneg %p66
        %p189 = pneg %p90
        %p190 = pneg %p87
        %p191 = pneg %p111
        %p192 = pneg %p108
        %p193 = pneg %p137
        %p194 = pneg %p134
        %s195 = sand.u32 %s124, 1
        %s196 = scalar_lea.sflag [#allocation9], %s195
        %s197 = sand.u32 %s124, 1
        %s198 = scalar_lea.vmem [#allocation8], %s197
        %p199 = scmp.lt.s32.totalorder %s27, 1
        %s200 = scalar_select %p199, %s27, 1
        %s201 = smul.addr %s200, 4
        %s202 = smul.addr %s201, 8
        %s203 = scalar_lea.vmem %s1, %s202
        %v204 = vlaneseq
        %v205 = vand.u32 %v204, 127
        %v206 = vlaneseq
        %v207 = vshrl.u32 %v206, 7
        %v208 = vadd.s32 %v207, 8
        %v209 = vadd.s32 %v207, 16
        %v210 = vadd.s32 %v207, 24
        %vm211 = vcmp.eq.s32.totalorder %v207, %v205
        %vm212 = vcmp.eq.s32.totalorder %v208, %v205
        %vm213 = vcmp.eq.s32.totalorder %v209, %v205
        %vm214 = vcmp.eq.s32.totalorder %v210, %v205
        %v215 = vsel %vm211, 1, 0
        %v216 = vsel %vm212, 1, 0
        %v217 = vsel %vm213, 1, 0
        %v218 = vsel %vm214, 1, 0
        %v219 = vcvt.s32.f32 %v215
        %v220 = vcvt.s32.f32 %v216
        %v221 = vcvt.s32.f32 %v217
        %v222 = vcvt.s32.f32 %v218
        %v223 = vld [vmem:[%s2] sm:$0xff]
        %v224 = vld [vmem:[%s2 + $0x8] sm:$0xff]
        %v225 = vld [vmem:[%s2 + $0x10] sm:$0xff]
        %v226 = vld [vmem:[%s2 + $0x18] sm:$0x7]
        %vm227 = vcmp.ge.s32.totalorder %v205, 10
        %v228 = vsel %vm227, 1, 0
        %vm229 = vcmp.ge.s32.totalorder %v205, 20
        %v230 = vsel %vm229, 1, 0
        %v231 = vadd.s32 %v228, %v230
        %vm232 = vcmp.ge.s32.totalorder %v205, 25
        %v233 = vsel %vm232, 1, 0
        %v234 = vadd.s32 %v231, %v233
        %vm235 = vcmp.ge.s32.totalorder %v205, 26
        %v236 = vsel %vm235, 1, 0
        %v237 = vadd.s32 %v234, %v236
        %v238 = vld [vmem:[%s203] sm:$0xff]
        %v239 = vld [vmem:[%s203 + $0x8] sm:$0xff]
        %v240 = vld [vmem:[%s203 + $0x10] sm:$0xff]
        %v241 = vld [vmem:[%s203 + $0x18] sm:$0xff]
        %vm242 = vcmp.eq.s32.totalorder %v237, 0
        %v243 = vsel %vm242, 1, 0
        %vm244 = vcmp.eq.s32.totalorder %v243, 1
        %246 = vset.pattern.permute.xlu0 0
        %247 = vperm.xlu0 %246, %v238
        %v248 = vpop.permute.xlu0 %247
        %251 = vset.pattern.permute.xlu0 0
        %252 = vperm.xlu0 %251, %v239
        %v253 = vpop.permute.xlu0 %252
        %256 = vset.pattern.permute.xlu0 0
        %257 = vperm.xlu0 %256, %v240
        %v258 = vpop.permute.xlu0 %257
        %261 = vset.pattern.permute.xlu0 0
        %262 = vperm.xlu0 %261, %v241
        %v263 = vpop.permute.xlu0 %262
        %v265 = vsel %vm244, %v248, 0.0
        %v266 = vsel %vm244, %v253, 0.0
        %v267 = vsel %vm244, %v258, 0.0
        %v268 = vsel %vm244, %v263, 0.0
        %vm269 = vcmp.eq.s32.totalorder %v237, 1
        %v270 = vsel %vm269, 1, 0
        %vm271 = vcmp.eq.s32.totalorder %v270, 1
        %272 = vset.pattern.permute.xlu0 1
        %273 = vperm.xlu0 %272, %v238
        %v274 = vpop.permute.xlu0 %273
        %276 = vset.pattern.permute.xlu0 1
        %277 = vperm.xlu0 %276, %v239
        %v278 = vpop.permute.xlu0 %277
        %280 = vset.pattern.permute.xlu0 1
        %281 = vperm.xlu0 %280, %v240
        %v282 = vpop.permute.xlu0 %281
        %284 = vset.pattern.permute.xlu0 1
        %285 = vperm.xlu0 %284, %v241
        %v286 = vpop.permute.xlu0 %285
        %v288 = vsel %vm271, %v274, %v265
        %v289 = vsel %vm271, %v278, %v266
        %v290 = vsel %vm271, %v282, %v267
        %v291 = vsel %vm271, %v286, %v268
        %vm292 = vcmp.eq.s32.totalorder %v237, 2
        %v293 = vsel %vm292, 1, 0
        %vm294 = vcmp.eq.s32.totalorder %v293, 1
        %295 = vset.pattern.permute.xlu0 2
        %296 = vperm.xlu0 %295, %v238
        %v297 = vpop.permute.xlu0 %296
        %299 = vset.pattern.permute.xlu0 2
        %300 = vperm.xlu0 %299, %v239
        %v301 = vpop.permute.xlu0 %300
        %303 = vset.pattern.permute.xlu0 2
        %304 = vperm.xlu0 %303, %v240
        %v305 = vpop.permute.xlu0 %304
        %307 = vset.pattern.permute.xlu0 2
        %308 = vperm.xlu0 %307, %v241
        %v309 = vpop.permute.xlu0 %308
        %v311 = vsel %vm294, %v297, %v288
        %v312 = vsel %vm294, %v301, %v289
        %v313 = vsel %vm294, %v305, %v290
        %v314 = vsel %vm294, %v309, %v291
        %vm315 = vcmp.eq.s32.totalorder %v237, 3
        %v316 = vsel %vm315, 1, 0
        %vm317 = vcmp.eq.s32.totalorder %v316, 1
        %318 = vset.pattern.permute.xlu0 3
        %319 = vperm.xlu0 %318, %v238
        %v320 = vpop.permute.xlu0 %319
        %322 = vset.pattern.permute.xlu0 3
        %323 = vperm.xlu0 %322, %v239
        %v324 = vpop.permute.xlu0 %323
        %326 = vset.pattern.permute.xlu0 3
        %327 = vperm.xlu0 %326, %v240
        %v328 = vpop.permute.xlu0 %327
        %330 = vset.pattern.permute.xlu0 3
        %331 = vperm.xlu0 %330, %v241
        %v332 = vpop.permute.xlu0 %331
        %v334 = vsel %vm317, %v320, %v311
        %v335 = vsel %vm317, %v324, %v312
        %v336 = vsel %vm317, %v328, %v313
        %v337 = vsel %vm317, %v332, %v314
        %vm338 = vcmp.eq.s32.totalorder %v237, 4
        %v339 = vsel %vm338, 1, 0
        %vm340 = vcmp.eq.s32.totalorder %v339, 1
        %341 = vset.pattern.permute.xlu0 4
        %342 = vperm.xlu0 %341, %v238
        %v343 = vpop.permute.xlu0 %342
        %345 = vset.pattern.permute.xlu0 4
        %346 = vperm.xlu0 %345, %v239
        %v347 = vpop.permute.xlu0 %346
        %349 = vset.pattern.permute.xlu0 4
        %350 = vperm.xlu0 %349, %v240
        %v351 = vpop.permute.xlu0 %350
        %353 = vset.pattern.permute.xlu0 4
        %354 = vperm.xlu0 %353, %v241
        %v355 = vpop.permute.xlu0 %354
        %v357 = vsel %vm340, %v343, %v334
        %v358 = vsel %vm340, %v347, %v335
        %v359 = vsel %vm340, %v351, %v336
        %v360 = vsel %vm340, %v355, %v337
        %vm361 = vcmask 220160
        %362 = vst.msk [vmem:[#allocation2] sm:$0xff] %vm361, %v357
        %363 = vst.msk [vmem:[#allocation2 + $0x8] sm:$0xff] %vm361, %v358
        %364 = vst.msk [vmem:[#allocation2 + $0x10] sm:$0xff] %vm361, %v359
        %365 = vst.msk [vmem:[#allocation2 + $0x18] sm:$0xff] %vm361, %v360
        %366 = vst.msk [vmem:[#allocation3] sm:$0xff] %vm361, 0
        %367 = vst.msk [vmem:[#allocation3 + $0x8] sm:$0xff] %vm361, 0
        %368 = vst.msk [vmem:[#allocation3 + $0x10] sm:$0xff] %vm361, 0
        %369 = vst.msk [vmem:[#allocation3 + $0x18] sm:$0xff] %vm361, 0
        %v370 = vld [vmem:[%s3] sm:$0x1]
        %v371 = vadd.f32 %v370, %v357
        %vm372 = vcmask 212992
        %373 = vst.msk [vmem:[#allocation4] sm:$0x1] %vm372, %v371
        loop: start=0, step=1, limit=31
        $region37: #{tpu_custom_call.1} parent=35 // loop_pre_header
          _
        $region38: #{tpu_custom_call.1} parent=35 // loop_header
          %s375 = sphi 0, %s379
          %p376 = scmp.ge.s32.totalorder %s375, 31
        $region39: #{tpu_custom_call.1} parent=35 // loop_header_branch
          %378 = sbr.rel (%p376) target = $region43
        $region40: #{tpu_custom_call.1} parent=35 // loop_body
          %s380 = sadd.s32 %s375, 1
          %v381 = vld [vmem:[#allocation4] sm:$0x1]
          %v383 = vperm.slane %v381, 0
          %v385 = vmul.f32 %v219, %v383
          %v386 = vmul.f32 %v220, %v383
          %v387 = vmul.f32 %v221, %v383
          %v388 = vmul.f32 %v222, %v383
          %v389 = vsel %vm361, %v385, 0.0
          %390 = vadd.xlane.f32.xlu0 %v389
          %v391 = vpop.xlane.xlu0 %390
          %v392 = vsel %vm361, %v386, 0.0
          %393 = vadd.xlane.f32.xlu0 %v392
          %v394 = vpop.xlane.xlu0 %393
          %v395 = vsel %vm361, %v387, 0.0
          %396 = vadd.xlane.f32.xlu0 %v395
          %v397 = vpop.xlane.xlu0 %396
          %vm398 = vcmask 215040
          %v399 = vsel %vm398, %v388, 0.0
          %400 = vadd.xlane.f32.xlu0 %v399
          %v401 = vpop.xlane.xlu0 %400
          %v402 = vadd.f32 %v223, %v391
          %v403 = vadd.f32 %v224, %v394
          %v404 = vadd.f32 %v225, %v397
          %v405 = vadd.f32 %v226, %v401
          %v406 = vsel %vm361, %v402, -inf
          %v407 = vsel %vm361, %v403, -inf
          %v408 = vsel %vm361, %v404, -inf
          %v409 = vsel %vm398, %v405, -inf
          %v410 = vmax.f32 %v406, %v407
          %v411 = vmax.f32 %v408, %v409
          %v412 = vmax.f32 %v410, %v411
          %v413 = vrot.slane %v412, 4
          %v414 = vmax.f32 %v412, %v413
          %v415 = vrot.slane %v414, 2
          %v416 = vmax.f32 %v414, %v415
          %v417 = vrot.slane %v416, 1
          %v418 = vmax.f32 %v416, %v417
          %vm419 = vcmp.eq.f32.partialorder %v402, %v418
          %vm420 = vcmp.eq.f32.partialorder %v403, %v418
          %vm421 = vcmp.eq.f32.partialorder %v404, %v418
          %vm422 = vcmp.eq.f32.partialorder %v405, %v418
          %v423 = vsel %vm419, %v207, 27
          %v424 = vsel %vm420, %v208, 27
          %v425 = vsel %vm421, %v209, 27
          %v426 = vsel %vm422, %v210, 27
          %v427 = vsel %vm361, %v423, 2147483647
          %v428 = vsel %vm361, %v424, 2147483647
          %v429 = vsel %vm361, %v425, 2147483647
          %v430 = vsel %vm398, %v426, 2147483647
          %vm431 = vcmp.lt.s32.totalorder %v427, %v428
          %v432 = vsel %vm431, %v427, %v428
          %vm433 = vcmp.lt.s32.totalorder %v429, %v430
          %v434 = vsel %vm433, %v429, %v430
          %vm435 = vcmp.lt.s32.totalorder %v432, %v434
          %v436 = vsel %vm435, %v432, %v434
          %v437 = vrot.slane %v436, 4
          %vm438 = vcmp.lt.s32.totalorder %v436, %v437
          %v439 = vsel %vm438, %v436, %v437
          %v440 = vrot.slane %v439, 2
          %vm441 = vcmp.lt.s32.totalorder %v439, %v440
          %v442 = vsel %vm441, %v439, %v440
          %v443 = vrot.slane %v442, 1
          %vm444 = vcmp.lt.s32.totalorder %v442, %v443
          %v445 = vsel %vm444, %v442, %v443
          %s446 = scalar_lea.vmem [#allocation3], %s375
          %447 = vst.msk [vmem:[%s446] sm:$0x1] %vm372, %v445
          %s448 = scalar_lea.vmem [#allocation2], %s380
          %v449 = vld [vmem:[%s448] sm:$0x1]
          %v450 = vadd.f32 %v418, %v449
          %s451 = sshra.s32 %s380, 7
          %s452 = sand.u32 %s380, 127
          %s453 = sadd.s32 %s451, %s27
          %s454 = smul.u32 %s453, 128
          %s455 = sshra.s32 %s380, 7
          %s456 = sand.u32 %s380, 127
          %s457 = sadd.s32 %s454, %s456
          %s458 = sld [smem:[#allocation7 + %s457]]
          %p459 = scmp.gt.s32.totalorder %s458, 0
          %s460 = scalar_select %p459, 1, 0
          %v461 = vstv %s460
          %vm462 = vcmp.eq.s32.totalorder %v461, 1
          %v463 = vsel %vm462, %v450, %v381
          %464 = vst.msk [vmem:[#allocation4] sm:$0x1] %vm372, %v463
        $region41: #{tpu_custom_call.1} parent=35 // loop_footer
          %s379 = sadd.s32 1, %s375
        $region42: #{tpu_custom_call.1} parent=35 // loop_footer_branch
          %374 = sbr.rel target = $region38
        $region43: #{tpu_custom_call.1} parent=35 // loop_exit
          _
        loop: start=0, step=1, limit=32
        $region44: #{tpu_custom_call.1} parent=35 // loop_pre_header
          _
        $region45: #{tpu_custom_call.1} parent=35 // loop_header
          %s466 = sphi 0, %s470
          %p467 = scmp.ge.s32.totalorder %s466, 32
          %s471 = sphi 0, %s480
        $region46: #{tpu_custom_call.1} parent=35 // loop_header_branch
          %469 = sbr.rel (%p467) target = $region50
        $region47: #{tpu_custom_call.1} parent=35 // loop_body
          %s472 = sshra.s32 %s466, 7
          %s473 = sand.u32 %s466, 127
          %s474 = sadd.s32 %s472, %s27
          %s475 = smul.u32 %s474, 128
          %s476 = sshra.s32 %s466, 7
          %s477 = sand.u32 %s466, 127
          %s478 = sadd.s32 %s475, %s477
          %s479 = sld [smem:[#allocation7 + %s478]]
          %s480 = sadd.s32 %s471, %s479
        $region48: #{tpu_custom_call.1} parent=35 // loop_footer
          %s470 = sadd.s32 1, %s466
        $region49: #{tpu_custom_call.1} parent=35 // loop_footer_branch
          %465 = sbr.rel target = $region45
        $region50: #{tpu_custom_call.1} parent=35 // loop_exit
          _
        %s481 = ssub.s32 %s471, 1
        %p482 = scmp.gt.s32.totalorder %s481, 0
        %s483 = scalar_select %p482, %s481, 0
        %v484 = vld [vmem:[#allocation4] sm:$0x1]
        %v485 = vld [vmem:[%s4] sm:$0x1]
        %v486 = vadd.f32 %v484, %v485
        %v487 = vsel %vm372, %v486, -inf
        %488 = vmax.xlane.f32.xlu0 %v487
        %v489 = vpop.xlane.xlu0 %488
        %vm490 = vcmp.eq.f32.partialorder %v486, %v489
        %v491 = vsel %vm490, %v205, 27
        %v492 = vsel %vm372, %v491, 2147483647
        %v493 = vand.u32 %v492, 65535
        %v494 = vshra.s32 %v492, 16
        %v495 = vcvt.s32.f32 %v493
        %v496 = vcvt.s32.f32 %v494
        %497 = vmin.xlane.f32.xlu0 %v496
        %v498 = vpop.xlane.xlu0 %497
        %vm499 = vcmp.eq.f32.partialorder %v496, %v498
        %v500 = vsel %vm499, %v495, inf
        %501 = vmin.xlane.f32.xlu0 %v500
        %v502 = vpop.xlane.xlu0 %501
        %v503 = vcvt.f32.s32 %v502
        %v504 = vcvt.f32.s32 %v498
        %v505 = vshll.u32 %v504, 16
        %v506 = vadd.s32 %v505, %v503
        %s507 = scalar_lea.vmem [#allocation3], %s483
        %508 = vst.msk [vmem:[%s507] sm:$0x1] %vm372, %v506
        %vm509 = vcmask 0
        %510 = vst.msk [vmem:[#allocation5] sm:$0x1] %vm509, 0
        %vm511 = vcmask 253952
        %512 = vst.msk [vmem:[%s198] sm:$0x1] %vm511, 0
        loop: start=0, step=1, limit=32
        $region51: #{tpu_custom_call.1} parent=35 // loop_pre_header
          _
        $region52: #{tpu_custom_call.1} parent=35 // loop_header
          %s514 = sphi 0, %s518
          %p515 = scmp.ge.s32.totalorder %s514, 32
        $region53: #{tpu_custom_call.1} parent=35 // loop_header_branch
          %517 = sbr.rel (%p515) target = $region57
        $region54: #{tpu_custom_call.1} parent=35 // loop_body
          %s519 = ssub.s32 31, %s514
          %s520 = scalar_lea.vmem [#allocation3], %s519
          %v521 = vld [vmem:[%s520] sm:$0x1]
          %v522 = vld [vmem:[#allocation5] sm:$0x1]
          %523 = vset.pattern.permute.xlu0 0
          %524 = vperm.xlu0 %523, %v522
          %v525 = vpop.permute.xlu0 %524
          %v526 = vperm.slane %v525, 0
          %vm527 = vcmp.eq.s32.totalorder %v205, %v526
          %v528 = vsel %vm527, %v521, 0
          %v529 = vsel %vm372, %v528, 0
          %v530 = vand.u32 %v529, 65535
          %v531 = vshrl.u32 %v529, 16
          %v532 = vcvt.s32.f32 %v530
          %v533 = vcvt.s32.f32 %v531
          %534 = vadd.xlane.f32.xlu0 %v532
          %v535 = vpop.xlane.xlu0 %534
          %536 = vadd.xlane.f32.xlu0 %v533
          %v537 = vpop.xlane.xlu0 %536
          %v538 = vcvt.f32.s32 %v535
          %v539 = vcvt.f32.s32 %v537
          %v540 = vshll.u32 %v539, 16
          %v541 = vadd.s32 %v540, %v538
          %542 = vst.msk [vmem:[#allocation5] sm:$0x1] %vm509, %v541
          %vm543 = vcmp.ge.s32.totalorder %v541, 5
          %v544 = vsel %vm543, 1, 0
          %vm545 = vcmp.ge.s32.totalorder %v541, 10
          %v546 = vsel %vm545, 1, 0
          %v547 = vadd.s32 %v544, %v546
          %vm548 = vcmp.ge.s32.totalorder %v541, 15
          %v549 = vsel %vm548, 1, 0
          %v550 = vadd.s32 %v547, %v549
          %vm551 = vcmp.ge.s32.totalorder %v541, 20
          %v552 = vsel %vm551, 1, 0
          %v553 = vadd.s32 %v550, %v552
          %vm554 = vcmp.ge.s32.totalorder %v541, 25
          %v555 = vsel %vm554, 1, 0
          %v556 = vadd.s32 %v553, %v555
          %vm557 = vcmp.ge.s32.totalorder %v541, 26
          %v558 = vsel %vm557, 1, 0
          %v559 = vadd.s32 %v556, %v558
          %v560 = vstv %s519
          %vm561 = vcmp.eq.s32.totalorder %v205, %v560
          %v562 = vld [vmem:[%s198] sm:$0x1]
          %v563 = vsel %vm561, %v559, %v562
          %564 = vst.msk [vmem:[%s198] sm:$0x1] %vm511, %v563
        $region55: #{tpu_custom_call.1} parent=35 // loop_footer
          %s518 = sadd.s32 1, %s514
        $region56: #{tpu_custom_call.1} parent=35 // loop_footer_branch
          %513 = sbr.rel target = $region52
        $region57: #{tpu_custom_call.1} parent=35 // loop_exit
          _
        %s565 = sand.u32 %s124, 1
        %s566 = scalar_lea.sflag [#allocation9], %s565
        %s567 = sand.u32 %s124, 1
        %s568 = scalar_lea.vmem [#allocation8], %s567
        // Predicated region
        $region58: #{tpu_custom_call.1} parent=35 // pred_check
          %p569 = pneg %p134
        $region59: #{tpu_custom_call.1} parent=35 // pred_check_branch
          %571 = sbr.rel (%p569) target = $region61
        $region60: #{tpu_custom_call.1} parent=35 // pred_region
          %573 = vsyncadd %s566, 0
          %s574 = scalar_lea.hbm %s5, %s27
          %s576 = sshll.u32 %s568, 4
          %s577 = int_to_ptr.vmem [resolvable:$true] %s576
          %s578 = sshll.u32 %s574, 4
          %s579 = int_to_ptr.hbm [resolvable:$true] %s578
          %581 = dma.vmem_to_hbm [thread:$0]  %s577, 16, %s579, %s566
        $region61: #{tpu_custom_call.1} parent=35 // pred_fallthru
          _
      $region36: #{tpu_custom_call.1} parent=5 // pred_fallthru
        _
      %p582 = scmp.le.s32.totalorder 2, %s22
      // Predicated region
      $region62: #{tpu_custom_call.1} parent=5 // pred_check
        %p583 = pneg %p582
      $region63: #{tpu_custom_call.1} parent=5 // pred_check_branch
        %585 = sbr.rel (%p583) target = $region65
      $region64: #{tpu_custom_call.1} parent=5 // pred_region
        %s586 = ssub.s32 %s22, 2
        // Predicated region
        $region66: #{tpu_custom_call.1} parent=64 // pred_check
          %p587 = pneg %p140
        $region67: #{tpu_custom_call.1} parent=64 // pred_check_branch
          %589 = sbr.rel (%p587) target = $region69
        $region68: #{tpu_custom_call.1} parent=64 // pred_region
          %s590 = sand.u32 %s125, 1
          %s591 = scalar_lea.sflag [#allocation9], %s590
          %s592 = sand.u32 %s125, 1
          %s593 = scalar_lea.vmem [#allocation8], %s592
          %595 = dma.done %s591, 16
        $region69: #{tpu_custom_call.1} parent=64 // pred_fallthru
          _
      $region65: #{tpu_custom_call.1} parent=5 // pred_fallthru
        _
    $region6: #{tpu_custom_call.1} parent=1 // loop_footer
      %s26 = sadd.s32 1, %s22
    $region7: #{tpu_custom_call.1} parent=1 // loop_footer_branch
      %21 = sbr.rel target = $region3
    $region8: #{tpu_custom_call.1} parent=1 // loop_exit
      _
    %596 = vsyncpa [#allocation9], 1
    %s597 = scalar_lea.sflag [#allocation9], 1
    %598 = vsyncpa %s597, 1

</llo_original>
